<compile_context>
chip_gen: v5e
topology: v5e:2x2
jax: 0.10.0
libtpu: 0.0.40
codegen_flags: <defaults>
</compile_context>

<pallas_src>
import math
import numpy as np
import jax
import jax.numpy as jnp
from jax.experimental import pallas as pl
from jax.experimental.pallas import tpu as pltpu


# ----------------------------------------------------------------------------
# __init__-equivalent precompute (pure numpy, no input data involved)
# ----------------------------------------------------------------------------
def cube2equirec_precompute(cube_size, out_h, out_w):
    """Replicates Cube2Equirec.get_grid2(): returns grid (6,H,W,2), orient (H,W,1)."""
    radius = int(0.5 * cube_size)
    theta = (math.pi - math.pi / out_w) - np.arange(out_w) * (2.0 * math.pi / out_w)
    phi = (0.5 * math.pi - 0.5 * math.pi / out_h) - np.arange(out_h) * (math.pi / out_h)
    theta_map = np.broadcast_to(theta[None, :], (out_h, out_w)).astype(np.float64)
    phi_map = np.broadcast_to(phi[:, None], (out_h, out_w)).astype(np.float64)

    x3 = radius * np.cos(phi_map) * np.sin(theta_map)
    y3 = radius * np.sin(phi_map)
    z3 = radius * np.cos(phi_map) * np.cos(theta_map)
    ball = np.stack([x3, y3, z3], axis=-1)  # (H, W, 3)

    def one_face(ratio_component, gw_sign, gw_axis, gh_sign, gh_axis, chk_axis, chk_sign):
        ratio = np.abs(ratio_component / radius)[..., None]
        raw = ball / ratio
        gw = gw_sign * raw[..., gw_axis] / radius
        gh = gh_sign * raw[..., gh_axis] / radius
        bounds = (gw <= 1) & (gw >= -1) & (gh <= 1) & (gh >= -1)
        mask = bounds & (np.round(raw[..., chk_axis]) == chk_sign * radius)
        return np.stack([gw, gh], axis=-1), mask

    #                     ratio, gw,        gh,        check
    g_back,  m_back  = one_face(z3, +1, 0, -1, 1, 2, -1)
    g_down,  m_down  = one_face(y3, -1, 0, -1, 2, 1, -1)
    g_front, m_front = one_face(z3, -1, 0, -1, 1, 2, +1)
    g_left,  m_left  = one_face(x3, +1, 2, -1, 1, 0, +1)
    g_right, m_right = one_face(x3, -1, 2, -1, 1, 0, -1)
    g_up,    m_up    = one_face(y3, -1, 0, +1, 2, 1, +1)

    grid = np.stack([g_back, g_down, g_front, g_left, g_right, g_up], axis=0)  # (6,H,W,2)
    orient = (m_back.astype(np.float64) * 0 + m_down * 1 + m_front * 2
              + m_left * 3 + m_right * 4 + m_up * 5)[..., None]                # (H,W,1)
    return grid.astype(np.float32), orient.astype(np.float32)


def build_bilinear_weight_matrix(grid, orient, cube_h, cube_w, out_h, out_w, face_stride):
    """W[6*face_stride, Ho*Wo]: bilinear grid_sample (align_corners=True, zeros pad)
    with per-orientation masking folded in.  Rows are face-major with each face
    occupying `face_stride` rows (zero-padded to keep K blocks face-aligned)."""
    P = out_h * out_w
    K = 6 * face_stride
    Wmat = np.zeros((K, P), dtype=np.float32)
    p_idx = np.arange(P)
    for ori in range(6):
        sel = (orient[:, :, 0].reshape(-1) == ori)
        gx = grid[ori, :, :, 0].reshape(-1).astype(np.float64)
        gy = grid[ori, :, :, 1].reshape(-1).astype(np.float64)
        ix = (gx + 1.0) * 0.5 * (cube_w - 1)
        iy = (gy + 1.0) * 0.5 * (cube_h - 1)
        ix0 = np.floor(ix)
        iy0 = np.floor(iy)
        for dy in (0, 1):
            for dx in (0, 1):
                xi = ix0 + dx
                yi = iy0 + dy
                w = (1.0 - np.abs(ix - xi)) * (1.0 - np.abs(iy - yi))
                inb = (xi >= 0) & (xi <= cube_w - 1) & (yi >= 0) & (yi <= cube_h - 1) & sel
                ww = np.where(inb, w, 0.0).astype(np.float32)
                xi_c = np.clip(xi, 0, cube_w - 1).astype(np.int64)
                yi_c = np.clip(yi, 0, cube_h - 1).astype(np.int64)
                k = ori * face_stride + yi_c * cube_w + xi_c
                np.add.at(Wmat, (k, p_idx), ww)
    return Wmat


def _round_up(v, m):
    return ((v + m - 1) // m) * m


def pick_vmem_limit_bytes():
    """Per-generation scoped-VMEM limit (v5e/v6e: 128 MiB phys -> 96 MiB;
    v7x: 64 MiB phys -> 48 MiB).  Falls back to 48 MiB if the query fails."""
    cap = 64 << 20
    try:
        cap = int(pltpu.get_tpu_info().vmem_capacity_bytes)
    except Exception:
        pass
    return max(32 << 20, min(96 << 20, (cap * 3) // 4))


def choose_tiles(M, kf_pad, P, dtype_bytes, vmem_budget):
    """Pick MXU/VMEM-friendly tiles sized to the per-generation VMEM budget.
    TK is face-aligned (divisor of kf_pad) so the block-sparse face skip holds."""
    K = 6 * kf_pad
    # M tile (rows of the matmul = folded G*C): full extent whenever reasonable.
    if M <= 512:
        TM = M
    else:
        TM = next((c for c in (512, 256, 128, 64, 32, 16, 8) if M % c == 0), M)
    tk_cands = sorted({c for c in (2048, 1024, 512, 256, 128) if kf_pad % c == 0}
                      | {kf_pad}, reverse=True)
    if P <= 4096:
        tp_cands = [P]
    else:
        tp_cands = sorted({c for c in (4096, 2048, 1024, 512, 256, 128) if P % c == 0}
                          | {P if P % 128 else 0} - {0}, reverse=True) or [P]

    def vmem_use(tk, tp):
        w_bytes = 2 * tk * tp * dtype_bytes      # double-buffered W tile (the big one)
        o_bytes = 2 * TM * tp * 4                # f32 out tile, resident across K
        x_bytes = 2 * TM * K * dtype_bytes       # x slab, resident per M tile
        return w_bytes + o_bytes + x_bytes

    best = None
    for tk in tk_cands:
        for tp in tp_cands:
            if vmem_use(tk, tp) <= vmem_budget and (best is None or tk * tp > best[0] * best[1]):
                best = (tk, tp)
    if best is None:
        best = (min(tk_cands), min(tp_cands))
    return TM, best[0], best[1]


def build_block_sparse_plan(Wmat, K, P, TK, TP):
    """Per P-tile list of contributing K-blocks.  Padding steps REPEAT the last
    valid K-block index: the unchanged block index lets the pipeline skip the W
    re-DMA, while the kernel's @pl.when(s < counts) guard skips the matmul."""
    num_kb = K // TK
    num_pb = P // TP
    nz = np.zeros((num_pb, num_kb), dtype=bool)
    for pb in range(num_pb):
        wp = Wmat[:, pb * TP:(pb + 1) * TP]
        for kb in range(num_kb):
            nz[pb, kb] = np.any(wp[kb * TK:(kb + 1) * TK, :] != 0.0)
    counts = nz.sum(axis=1).astype(np.int32)
    nsteps = int(max(1, counts.max()))
    kmap = np.zeros((num_pb, nsteps), dtype=np.int32)
    for pb in range(num_pb):
        ks = np.nonzero(nz[pb])[0].astype(np.int32)
        if ks.size == 0:
            ks = np.zeros((1,), np.int32)      # no contribution; guard skips compute
        if ks.size < nsteps:
            ks = np.concatenate([ks, np.full(nsteps - ks.size, ks[-1], np.int32)])
        kmap[pb] = ks
    # flatten to 1-D so the SMEM footprint stays tiny (2-D SMEM pads to x128 cols)
    return kmap.reshape(-1), counts, nsteps


# ----------------------------------------------------------------------------
# Pallas kernel: block-sparse tiled matmul  out[M, P] = x[M, K] @ W[K, P]
# ----------------------------------------------------------------------------
def _c2e_kernel(kmap_ref, counts_ref, x_ref, w_ref, o_ref):
    pt = pl.program_id(1)
    s = pl.program_id(2)
    nsteps = pl.num_programs(2)

    @pl.when(s == 0)
    def _init():
        o_ref[...] = jnp.zeros_like(o_ref)

    # Load-bearing guard: padded steps reuse the previous step's W block (which
    # is NOT all-zero), so they must not contribute to the accumulation.
    @pl.when(s < counts_ref[pt])
    def _accumulate():
        kb = kmap_ref[pt * nsteps + s]
        o_ref[...] += jnp.dot(x_ref[kb], w_ref[...],
                              preferred_element_type=jnp.float32)


def cube2equirec_forward(x, Wmat, kmap, counts, *, cube_h, cube_w, kf_pad,
                         out_h, out_w, tm, tk, tp, nsteps, vmem_limit_bytes):
    B, C, Hc, Wc = x.shape
    assert Hc == cube_h and Wc == cube_w and B % 6 == 0
    G = B // 6
    Kf = Hc * Wc
    K = 6 * kf_pad
    P = out_h * out_w
    M = G * C
    TM, TK, TP = tm, tk, tp
    assert M % TM == 0 and K % TK == 0 and P % TP == 0
    num_mb, num_kb, num_pb = M // TM, K // TK, P // TP
    assert kmap.shape[0] == num_pb * nsteps and counts.shape[0] == num_pb

    compute_dtype = Wmat.dtype  # W is already stored in the compute dtype (no per-call cast)

    # Fold (G, C) into the MXU M dimension, face-major K to match W's rows, then
    # lay x out K-block-major so the whole (num_kb, TM, TK) slab can stay
    # VMEM-resident and be indexed dynamically inside the kernel (x is tiny).
    xf = jnp.transpose(x.reshape(G, 6, C, Kf), (0, 2, 1, 3))        # (G, C, 6, Kf)
    if kf_pad > Kf:
        xf = jnp.pad(xf, ((0, 0), (0, 0), (0, 0), (0, kf_pad - Kf)))
    xf = xf.reshape(M, K).astype(compute_dtype)
    xkb = jnp.transpose(xf.reshape(M, num_kb, TK), (1, 0, 2))       # (num_kb, M, TK)

    x_spec = pl.BlockSpec((num_kb, TM, TK), lambda mt, pt, s, km, cnt: (0, mt, 0))
    w_spec = pl.BlockSpec((TK, TP), lambda mt, pt, s, km, cnt: (km[pt * nsteps + s], pt))
    o_spec = pl.BlockSpec((TM, TP), lambda mt, pt, s, km, cnt: (mt, pt))

    out_flat = pl.pallas_call(
        _c2e_kernel,
        out_shape=jax.ShapeDtypeStruct((M, P), jnp.float32),
        grid_spec=pltpu.PrefetchScalarGridSpec(
            num_scalar_prefetch=2,
            grid=(num_mb, num_pb, nsteps),
            in_specs=[x_spec, w_spec],
            out_specs=o_spec,
        ),
        compiler_params=pltpu.CompilerParams(
            dimension_semantics=("parallel", "parallel", "arbitrary"),
            vmem_limit_bytes=vmem_limit_bytes),
    )(kmap, counts, xkb, Wmat)
    return out_flat.reshape(G, C, out_h, out_w)


# ----------------------------------------------------------------------------
# Pure numpy reference of the torch forward (grid_sample loop) for validation
# ----------------------------------------------------------------------------
def reference_forward_numpy(x, grid, orient, cube_h, cube_w, out_h, out_w):
    B, C, _, _ = x.shape
    G = B // 6
    out = np.zeros((G, C, out_h, out_w), np.float32)
    for g in range(G):
        for ori in range(6):
            sel = (orient[:, :, 0] == ori)
            gx = grid[ori, :, :, 0] * sel
            gy = grid[ori, :, :, 1] * sel
            ix = (gx + 1.0) * 0.5 * (cube_w - 1)
            iy = (gy + 1.0) * 0.5 * (cube_h - 1)
            ix0 = np.floor(ix)
            iy0 = np.floor(iy)
            face = x[g * 6 + ori]  # (C, Hc, Wc)
            sampled = np.zeros((C, out_h, out_w), np.float32)
            for dy in (0, 1):
                for dx in (0, 1):
                    xi = ix0 + dx
                    yi = iy0 + dy
                    w = (1.0 - np.abs(ix - xi)) * (1.0 - np.abs(iy - yi))
                    inb = (xi >= 0) & (xi < cube_w) & (yi >= 0) & (yi < cube_h)
                    xi_c = np.clip(xi, 0, cube_w - 1).astype(np.int64)
                    yi_c = np.clip(yi, 0, cube_h - 1).astype(np.int64)
                    vals = face[:, yi_c, xi_c]
                    sampled += vals * (w * inb)[None].astype(np.float32)
            out[g] += sampled * sel[None].astype(np.float32)
    return out


if __name__ == "__main__":
    cube_size = 16
    out_h, out_w = 16, 32
    B, C = 12, 4  # 2 panorama groups of 6 faces each

    # ---- __init__-equivalent precompute (numpy) ----
    grid_np, orient_np = cube2equirec_precompute(cube_size, out_h, out_w)
    Kf = cube_size * cube_size
    kf_pad = max(128, _round_up(Kf, 128))          # face-aligned, lane-friendly K blocks
    Wmat_np = build_bilinear_weight_matrix(grid_np, orient_np, cube_size, cube_size,
                                           out_h, out_w, face_stride=kf_pad)

    G = B // 6
    K = 6 * kf_pad
    P = out_h * out_w
    M = G * C

    vmem_limit = pick_vmem_limit_bytes()
    TM, TK, TP = choose_tiles(M, kf_pad, P, dtype_bytes=4,
                              vmem_budget=int(vmem_limit * 0.7))
    kmap_np, counts_np, nsteps = build_block_sparse_plan(Wmat_np, K, P, TK, TP)

    kmap = jnp.asarray(kmap_np)
    counts = jnp.asarray(counts_np)
    # Pre-cast W ONCE at setup time (largest array; never re-cast per call).
    Wmat_f32 = jnp.asarray(Wmat_np)
    Wmat_bf16 = jnp.asarray(Wmat_np).astype(jnp.bfloat16)

    key = jax.random.PRNGKey(0)
    x = jax.random.normal(key, (B, C, cube_size, cube_size), dtype=jnp.float32)

    def run(Wm):
        return cube2equirec_forward(
            x, Wm, kmap, counts,
            cube_h=cube_size, cube_w=cube_size, kf_pad=kf_pad,
            out_h=out_h, out_w=out_w,
            tm=TM, tk=TK, tp=TP, nsteps=nsteps, vmem_limit_bytes=vmem_limit)

    # ---- f32 path (strict check) ----
    out = jax.block_until_ready(run(Wmat_f32))
    ref = reference_forward_numpy(np.asarray(x), grid_np, orient_np,
                                  cube_size, cube_size, out_h, out_w)
    assert out.shape == (B // 6, C, out_h, out_w)
    np.testing.assert_allclose(np.asarray(out), ref, rtol=1e-4, atol=1e-4)

    # ---- bf16 W path (halves W HBM bytes on this bandwidth-bound op), f32 acc.
    # bf16 tap weights no longer sum to exactly 1 per pixel (~0.3-1% error) —
    # acceptable for image resampling.
    out_bf16 = jax.block_until_ready(run(Wmat_bf16))
    np.testing.assert_allclose(np.asarray(out_bf16), ref, rtol=5e-2, atol=5e-2)

    print("KERNEL_OK")
</pallas_src>

<mosaic_0001>
module attributes {stable_mosaic.version = 11 : i64} {
  func.func @_c2e_kernel(%arg0: i32, %arg1: i32, %arg2: i32, %arg3: memref<6xi32, #tpu.memory_space<smem>>, %arg4: memref<1xi32, #tpu.memory_space<smem>>, %arg5: memref<6x8x256xf32, #tpu.memory_space<vmem>>, %arg6: memref<256x512xf32, #tpu.memory_space<vmem>>, %arg7: memref<8x512xf32, #tpu.memory_space<vmem>>) attributes {dimension_semantics = [#tpu.dimension_semantics<parallel>, #tpu.dimension_semantics<parallel>, #tpu.dimension_semantics<arbitrary>], iteration_bounds = array<i64: 1, 1, 6>, scalar_prefetch = 2 : i64, scratch_operands = 0 : i64, tpu.core_type = #tpu.core_type<tc>, window_params = [{transform_indices = @transform_0, window_bounds = array<i64: 6, 8, 256>}, {transform_indices = @transform_1, window_bounds = array<i64: 256, 512>}, {transform_indices = @transform_2, window_bounds = array<i64: 8, 512>}]} {
    %c0_i32 = arith.constant 0 : i32
    %0 = arith.cmpi eq, %arg2, %c0_i32 : i32
    %1 = arith.extui %0 : i1 to i32
    %c0_i32_0 = arith.constant 0 : i32
    %2 = arith.cmpi ne, %1, %c0_i32_0 : i32
    scf.if %2 {
      %cst = arith.constant 0.000000e+00 : f32
      %8 = vector.broadcast %cst : f32 to vector<8x512xf32>
      %c0 = arith.constant 0 : index
      %c0_2 = arith.constant 0 : index
      %9 = vector.load %arg7[%c0, %c0_2] : memref<8x512xf32, #tpu.memory_space<vmem>>, vector<8x512xf32>
      tpu.vector_store %arg7[%c0, %c0_2], %8 {strides = array<i32>} : memref<8x512xf32, #tpu.memory_space<vmem>>, vector<8x512xf32>,
    } else {
    }
    %3 = arith.index_cast %arg1 : i32 to index
    %4 = memref.load %arg4[%3] : memref<1xi32, #tpu.memory_space<smem>>
    %5 = arith.cmpi slt, %arg2, %4 : i32
    %6 = arith.extui %5 : i1 to i32
    %c0_i32_1 = arith.constant 0 : i32
    %7 = arith.cmpi ne, %6, %c0_i32_1 : i32
    scf.if %7 {
      %c6_i32 = arith.constant 6 : i32
      %8 = arith.muli %arg1, %c6_i32 : i32
      %9 = arith.addi %8, %arg2 : i32
      %10 = arith.index_cast %9 : i32 to index
      %11 = memref.load %arg3[%10] : memref<6xi32, #tpu.memory_space<smem>>
      %c0 = arith.constant 0 : index
      %c0_2 = arith.constant 0 : index
      %12 = vector.load %arg7[%c0, %c0_2] : memref<8x512xf32, #tpu.memory_space<vmem>>, vector<8x512xf32>
      %13 = arith.index_cast %11 : i32 to index
      %c0_3 = arith.constant 0 : index
      %c0_4 = arith.constant 0 : index
      %14 = vector.load %arg5[%13, %c0_3, %c0_4] : memref<6x8x256xf32, #tpu.memory_space<vmem>>, vector<1x8x256xf32>
      %15 = vector.shape_cast %14 : vector<1x8x256xf32> to vector<8x256xf32>
      %c0_5 = arith.constant 0 : index
      %c0_6 = arith.constant 0 : index
      %16 = vector.load %arg6[%c0_5, %c0_6] : memref<256x512xf32, #tpu.memory_space<vmem>>, vector<256x512xf32>
      %cst = arith.constant dense<0.000000e+00> : vector<8x512xf32>
      %17 = tpu.matmul %15, %16, %cst {dimension_numbers = #tpu.dot_dimension_numbers<[1], [0], [0], [1], [0, 0, 1, 1], [], []>} : vector<8x256xf32>, vector<256x512xf32>, vector<8x512xf32> -> vector<8x512xf32>
      %18 = arith.addf %12, %17 : vector<8x512xf32>
      %c0_7 = arith.constant 0 : index
      %c0_8 = arith.constant 0 : index
      %19 = vector.load %arg7[%c0_7, %c0_8] : memref<8x512xf32, #tpu.memory_space<vmem>>, vector<8x512xf32>
      tpu.vector_store %arg7[%c0_7, %c0_8], %18 {strides = array<i32>} : memref<8x512xf32, #tpu.memory_space<vmem>>, vector<8x512xf32>,
    } else {
    }
    return
  }
  func.func @transform_0(%arg0: i32, %arg1: i32, %arg2: i32, %arg3: memref<6xi32, #tpu.memory_space<smem>>, %arg4: memref<1xi32, #tpu.memory_space<smem>>) -> (i32, i32, i32) {
    %c0_i32 = arith.constant 0 : i32
    %c0_i32_0 = arith.constant 0 : i32
    %c0_i32_1 = arith.constant 0 : i32
    return %c0_i32, %arg0, %c0_i32_0 : i32, i32, i32
  }
  func.func @transform_1(%arg0: i32, %arg1: i32, %arg2: i32, %arg3: memref<6xi32, #tpu.memory_space<smem>>, %arg4: memref<1xi32, #tpu.memory_space<smem>>) -> (i32, i32) {
    %c6_i32 = arith.constant 6 : i32
    %0 = arith.muli %arg1, %c6_i32 : i32
    %1 = arith.addi %0, %arg2 : i32
    %2 = arith.index_cast %1 : i32 to index
    %3 = memref.load %arg3[%2] : memref<6xi32, #tpu.memory_space<smem>>
    %c0_i32 = arith.constant 0 : i32
    return %3, %arg1 : i32, i32
  }
  func.func @transform_2(%arg0: i32, %arg1: i32, %arg2: i32, %arg3: memref<6xi32, #tpu.memory_space<smem>>, %arg4: memref<1xi32, #tpu.memory_space<smem>>) -> (i32, i32) {
    %c0_i32 = arith.constant 0 : i32
    return %arg0, %arg1 : i32, i32
  }
}

</mosaic_0001>

<llo_original>
// kernel: tpu_custom_call.1
$region0: #{tpu_custom_call.1}
  #allocation0 [shape = 'u32[]', space=smem, size = 0x4, offset = 0x4, fixed_abs, tag = 'smem constant byte address 0x4 - core index']
  #allocation1 [shape = 'u32[72,128]{1,0:T(1,128)}', space=vmem, size = 0x9000, scoped, tag = 'internal scratch']
  #allocation2 [shape = 's32[1]{0}', space=sflag, size = 0x4, scoped, tag = 'scoped memory for tpu_custom_call.1']
  #allocation3 [shape = 'u8[512]{0}', space=smem, size = 0x200, scoped, tag = 'prefetched SMEM operand 0']
  #allocation4 [shape = 's32[1]{0:T(128)S(6)}', space=smem, size = 0x200, scoped, tag = 'prefetched SMEM operand 1']
  %s0 = inlined_call_operand.hbm [shape: s32[6], index: 0, kind: input, shape index: {}]
  %s1 = inlined_call_operand.<no memory space> [shape: s32[1], index: 1, kind: input, shape index: {}]
  %s2 = inlined_call_operand.hbm [shape: f32[6,8,256], index: 2, kind: input, shape index: {}]
  %s3 = inlined_call_operand.hbm [shape: f32[1536,512], index: 3, kind: input, shape index: {}]
  %s4 = inlined_call_operand.hbm [shape: f32[8,512], index: 4, kind: output, shape index: {}]
  %s5 = sld [smem:[#allocation0]]
  $region57: #{tpu_custom_call.1} parent=0
    _
  %s7 = ssub.s32 1, %s5
  %s8 = scalar_select 0, %s7, %s5
  %s10 = sshll.u32 %s0, 4
  %s11 = int_to_ptr.hbm [resolvable:$true] %s10
  %13 = dma.hbm_to_smem %s11, 16, [#allocation3], [#allocation2]
  %14 = sst [smem:[#allocation4]] %s1
  %16 = dma.done [#allocation2], 16
  %17 = sfence
  $region1: #{tpu_custom_call.1} parent=0
    #allocation5 [shape = 'u8[49152]{0}', space=vmem, size = 0xc000, scoped, tag = 'input window, operand 2, single buffered']
    #allocation6 [shape = 's32[2]{0}', space=sflag, size = 0x8, scoped, tag = 'scoped memory for tpu_custom_call.1']
    #allocation7 [shape = 's32[2]{0}', space=sflag, size = 0x8, scoped, tag = 'scoped memory for tpu_custom_call.1']
    #allocation8 [shape = 'u8[1048576]{0}', space=vmem, size = 0x100000, scoped, tag = 'input window, operand 3']
    #allocation9 [shape = 's32[2]{0}', space=sflag, size = 0x8, scoped, tag = 'scoped memory for tpu_custom_call.1']
    #allocation10 [shape = 'u8[16384]{0}', space=vmem, size = 0x4000, scoped, tag = 'output window, operand 0, single buffered']
    %18 = vsyncpa [#allocation6], 0
    %19 = vsyncpa [#allocation9], 0
    %s20 = scalar_lea.sflag [#allocation9], 1
    %21 = vsyncpa %s20, 0
    %22 = vsyncpa [#allocation7], 0
    loop: start=0, step=1, limit=8
    $region2: #{tpu_custom_call.1} parent=1 // loop_pre_header
      _
    $region3: #{tpu_custom_call.1} parent=1 // loop_header
      %s24 = sphi 0, %s28
      %p25 = scmp.ge.s32.totalorder %s24, 8
      %s31 = sphi 0, %s50
      %s32 = sphi 0, %s46
      %s33 = sphi 0, %s42
      %s34 = sphi 0, %s31
      %s35 = sphi 0, %s32
      %s36 = sphi 0, %s33
      %s37 = sphi 0, %s34
      %s38 = sphi 0, %s35
      %s39 = sphi 0, %s36
      %s53 = sphi 0, %s55
      %s56 = sphi 0, %s53
      %s57 = sphi 0, %s56
      %s73 = sphi 0, %s57
      %s87 = sphi 0, %s89
      %s90 = sphi 0, %s87
      %s91 = sphi 0, %s90
      %s107 = sphi 0, %s91
      %s115 = sphi 0, %s117
      %s118 = sphi 0, %s115
      %s119 = sphi 0, %s118
      %s135 = sphi 0, %s119
    $region4: #{tpu_custom_call.1} parent=1 // loop_header_branch
      %27 = sbr.rel (%p25) target = $region8
    $region5: #{tpu_custom_call.1} parent=1 // loop_body
      %s29 = ssub.s32 %s24, 1
      %s30 = ssub.s32 %s24, 2
      %s40 = sadd.s32 1, %s33
      %p41 = scmp.ge.s32.totalorder %s40, 6
      %s42 = scalar_select %p41, 0, %s40
      %s43 = sadd.s32 1, %s32
      %s44 = scalar_select %p41, %s43, %s32
      %p45 = scmp.ge.s32.totalorder %s44, 1
      %s46 = scalar_select %p45, 0, %s44
      %s47 = sadd.s32 1, %s31
      %s48 = scalar_select %p45, %s47, %s31
      %p49 = scmp.ge.s32.totalorder %s48, 1
      %s50 = scalar_select %p49, 0, %s48
      %s51 = ssub.s32 %s31, %s50
      %p52 = scmp.eq.s32.totalorder %s51, 0
      %s54 = sadd.s32 %s53, 1
      %s55 = scalar_select %p52, %s53, %s54
      %p58 = pneg %p52
      %p59 = scmp.eq.s32.totalorder %s24, 5
      %p60 = por %p58, %p59
      %p61 = scmp.ne.s32.totalorder %s53, %s56
      %p62 = scmp.eq.s32.totalorder %s24, 0
      %p63 = por %p61, %p62
      %p64 = scmp.ne.s32.totalorder %s53, %s56
      %p65 = scmp.eq.s32.totalorder %s29, 5
      %p66 = por %p64, %p65
      %p67 = scmp.ne.s32.totalorder %s56, %s57
      %p68 = scmp.eq.s32.totalorder %s29, 0
      %p69 = por %p67, %p68
      %p70 = scmp.ne.s32.totalorder %s56, %s57
      %p71 = scmp.eq.s32.totalorder %s30, 5
      %p72 = por %p70, %p71
      %p74 = scmp.ne.s32.totalorder %s57, %s73
      %p75 = scmp.eq.s32.totalorder %s30, 0
      %p76 = por %p74, %p75
      %s77 = smul.u32 %s32, 6
      %s78 = sadd.s32 %s77, %s33
      %s79 = sld [smem:[#allocation3 + %s78]]
      %s80 = smul.u32 %s46, 6
      %s81 = sadd.s32 %s80, %s42
      %s82 = sld [smem:[#allocation3 + %s81]]
      %s83 = ssub.s32 %s79, %s82
      %s84 = ssub.s32 %s32, %s46
      %s85 = sor.u32 %s83, %s84
      %p86 = scmp.eq.s32.totalorder %s85, 0
      %s88 = sadd.s32 %s87, 1
      %s89 = scalar_select %p86, %s87, %s88
      %p92 = pneg %p86
      %p93 = scmp.eq.s32.totalorder %s24, 5
      %p94 = por %p92, %p93
      %p95 = scmp.ne.s32.totalorder %s87, %s90
      %p96 = scmp.eq.s32.totalorder %s24, 0
      %p97 = por %p95, %p96
      %p98 = scmp.ne.s32.totalorder %s87, %s90
      %p99 = scmp.eq.s32.totalorder %s29, 5
      %p100 = por %p98, %p99
      %p101 = scmp.ne.s32.totalorder %s90, %s91
      %p102 = scmp.eq.s32.totalorder %s29, 0
      %p103 = por %p101, %p102
      %p104 = scmp.ne.s32.totalorder %s90, %s91
      %p105 = scmp.eq.s32.totalorder %s30, 5
      %p106 = por %p104, %p105
      %p108 = scmp.ne.s32.totalorder %s91, %s107
      %p109 = scmp.eq.s32.totalorder %s30, 0
      %p110 = por %p108, %p109
      %s111 = ssub.s32 %s31, %s50
      %s112 = ssub.s32 %s32, %s46
      %s113 = sor.u32 %s111, %s112
      %p114 = scmp.eq.s32.totalorder %s113, 0
      %s116 = sadd.s32 %s115, 1
      %s117 = scalar_select %p114, %s115, %s116
      %p120 = pneg %p114
      %p121 = scmp.eq.s32.totalorder %s24, 5
      %p122 = por %p120, %p121
      %p123 = scmp.ne.s32.totalorder %s115, %s118
      %p124 = scmp.eq.s32.totalorder %s24, 0
      %p125 = por %p123, %p124
      %p126 = scmp.ne.s32.totalorder %s115, %s118
      %p127 = scmp.eq.s32.totalorder %s29, 5
      %p128 = por %p126, %p127
      %p129 = scmp.ne.s32.totalorder %s118, %s119
      %p130 = scmp.eq.s32.totalorder %s29, 0
      %p131 = por %p129, %p130
      %p132 = scmp.ne.s32.totalorder %s118, %s119
      %p133 = scmp.eq.s32.totalorder %s30, 5
      %p134 = por %p132, %p133
      %p136 = scmp.ne.s32.totalorder %s119, %s135
      %p137 = scmp.eq.s32.totalorder %s30, 0
      %p138 = por %p136, %p137
      %p139 = scmp.le.s32.totalorder 1, %s24
      %p140 = scmp.lt.s32.totalorder %s24, 7
      %p141 = pnand %p139, %p140
      %p142 = pneg %p141
      // Predicated region
      $region9: #{tpu_custom_call.1} parent=5 // pred_check
        _
      $region10: #{tpu_custom_call.1} parent=5 // pred_check_branch
        %144 = sbr.rel (%p141) target = $region12
      $region11: #{tpu_custom_call.1} parent=5 // pred_region
        %s145 = ssub.s32 %s24, 1
        // Predicated region
        $region13: #{tpu_custom_call.1} parent=11 // pred_check
          %p146 = pneg %p69
        $region14: #{tpu_custom_call.1} parent=11 // pred_check_branch
          %148 = sbr.rel (%p146) target = $region16
        $region15: #{tpu_custom_call.1} parent=11 // pred_region
          %150 = vsyncadd [#allocation6], 0
          %s151 = smul.addr %s34, 2
          %s152 = smul.addr %s151, 8
          %s153 = scalar_lea.hbm %s2, %s152
          %s154 = sshll.u32 %s153, 4
          %s155 = int_to_ptr.hbm [resolvable:$true] %s154
          %s156 = sshll.u32 [#allocation5], 4
          %s157 = int_to_ptr.vmem [resolvable:$true] %s156
          %162 = dma.hbm_to_vmem [thread:$0]  %s155, 1536, %s157, [#allocation6], 256, 256, 16
        $region16: #{tpu_custom_call.1} parent=11 // pred_fallthru
          _
      $region12: #{tpu_custom_call.1} parent=5 // pred_fallthru
        _
      %p163 = scmp.lt.s32.totalorder %s24, 6
      // Predicated region
      $region17: #{tpu_custom_call.1} parent=5 // pred_check
        %p164 = pneg %p163
      $region18: #{tpu_custom_call.1} parent=5 // pred_check_branch
        %166 = sbr.rel (%p164) target = $region20
      $region19: #{tpu_custom_call.1} parent=5 // pred_region
        // Predicated region
        $region21: #{tpu_custom_call.1} parent=19 // pred_check
          %p167 = pneg %p97
        $region22: #{tpu_custom_call.1} parent=19 // pred_check_branch
          %169 = sbr.rel (%p167) target = $region24
        $region23: #{tpu_custom_call.1} parent=19 // pred_region
          %s170 = sand.u32 %s87, 1
          %s171 = scalar_lea.sflag [#allocation9], %s170
          %s172 = sand.u32 %s87, 1
          %s173 = smul.addr %s172, 1024
          %s174 = scalar_lea.vmem [#allocation8], %s173
          %s175 = smul.u32 %s32, 6
          %s176 = sadd.s32 %s175, %s33
          %s177 = sld [smem:[#allocation3 + %s176]]
          %s178 = smul.u32 32, %s177
          %s179 = smul.u32 4, %s32
          %181 = vsyncadd %s171, 0
          %s182 = smul.addr %s178, 4
          %s183 = sadd.s32 %s179, %s182
          %s184 = smul.addr %s183, 8
          %s185 = scalar_lea.hbm %s3, %s184
          %s186 = sshll.u32 %s185, 4
          %s187 = int_to_ptr.hbm [resolvable:$true] %s186
          %s188 = sshll.u32 %s174, 4
          %s189 = int_to_ptr.vmem [resolvable:$true] %s188
          %194 = dma.hbm_to_vmem [thread:$0]  %s187, 16384, %s189, %s171, 512, 512, 32
        $region24: #{tpu_custom_call.1} parent=19 // pred_fallthru
          _
      $region20: #{tpu_custom_call.1} parent=5 // pred_fallthru
        _
      %p195 = scmp.le.s32.totalorder 1, %s24
      %p196 = scmp.lt.s32.totalorder %s24, 7
      %p197 = pnand %p195, %p196
      %p198 = pneg %p197
      // Predicated region
      $region25: #{tpu_custom_call.1} parent=5 // pred_check
        _
      $region26: #{tpu_custom_call.1} parent=5 // pred_check_branch
        %200 = sbr.rel (%p197) target = $region28
      $region27: #{tpu_custom_call.1} parent=5 // pred_region
        %s201 = ssub.s32 %s24, 1
        // Predicated region
        $region29: #{tpu_custom_call.1} parent=27 // pred_check
          %p202 = pneg %p69
        $region30: #{tpu_custom_call.1} parent=27 // pred_check_branch
          %204 = sbr.rel (%p202) target = $region32
        $region31: #{tpu_custom_call.1} parent=27 // pred_region
          %206 = dma.done [#allocation6], 1536
        $region32: #{tpu_custom_call.1} parent=27 // pred_fallthru
          _
        %s207 = sand.u32 %s90, 1
        %s208 = scalar_lea.sflag [#allocation9], %s207
        %s209 = sand.u32 %s90, 1
        %s210 = smul.addr %s209, 1024
        %s211 = scalar_lea.vmem [#allocation8], %s210
        // Predicated region
        $region33: #{tpu_custom_call.1} parent=27 // pred_check
          %p212 = pneg %p103
        $region34: #{tpu_custom_call.1} parent=27 // pred_check_branch
          %214 = sbr.rel (%p212) target = $region36
        $region35: #{tpu_custom_call.1} parent=27 // pred_region
          %216 = dma.done %s208, 16384
        $region36: #{tpu_custom_call.1} parent=27 // pred_fallthru
          _
        %p217 = pneg %p69
        %p218 = pneg %p66
        %s219 = sand.u32 %s90, 1
        %s220 = scalar_lea.sflag [#allocation9], %s219
        %s221 = sand.u32 %s90, 1
        %s222 = smul.addr %s221, 1024
        %s223 = scalar_lea.vmem [#allocation8], %s222
        %p224 = pneg %p103
        %p225 = pneg %p100
        %p226 = pneg %p131
        %p227 = pneg %p128
        %s228 = smul.u32 %s35, 6
        %s229 = sadd.s32 %s228, %s36
        %s230 = sld [smem:[#allocation3 + %s229]]
        %s231 = smul.u32 32, %s230
        %s232 = smul.u32 4, %s35
        %s233 = smul.u32 4, %s35
        %p234 = scmp.eq.s32.totalorder %s36, 0
        // Predicated region
        $region37: #{tpu_custom_call.1} parent=27 // pred_check
          %p235 = pneg %p234
        $region38: #{tpu_custom_call.1} parent=27 // pred_check_branch
          %237 = sbr.rel (%p235) target = $region40
        $region39: #{tpu_custom_call.1} parent=27 // pred_region
          %238 = vst [vmem:[#allocation10] sm:$0xff] 0.0
          %239 = vst [vmem:[#allocation10 + $0x8] sm:$0xff] 0.0
          %240 = vst [vmem:[#allocation10 + $0x10] sm:$0xff] 0.0
          %241 = vst [vmem:[#allocation10 + $0x18] sm:$0xff] 0.0
        $region40: #{tpu_custom_call.1} parent=27 // pred_fallthru
          _
        %s242 = sld [smem:[#allocation4 + %s35]]
        %p243 = scmp.lt.s32.totalorder %s36, %s242
        // Predicated region
        $region41: #{tpu_custom_call.1} parent=27 // pred_check
          %p244 = pneg %p243
        $region42: #{tpu_custom_call.1} parent=27 // pred_check_branch
          %246 = sbr.rel (%p244) target = $region44
        $region43: #{tpu_custom_call.1} parent=27 // pred_region
          %s247 = smul.u32 %s35, 6
          %s248 = sadd.s32 %s247, %s36
          %s249 = sld [smem:[#allocation3 + %s248]]
          %v250 = vld [vmem:[#allocation10] sm:$0xff]
          %v251 = vld [vmem:[#allocation10 + $0x8] sm:$0xff]
          %v252 = vld [vmem:[#allocation10 + $0x10] sm:$0xff]
          %v253 = vld [vmem:[#allocation10 + $0x18] sm:$0xff]
          %s254 = smul.u32 %s249, 2
          %s255 = smul.addr %s254, 8
          %s256 = scalar_lea.vmem [#allocation5], %s255
          %v257 = vld [vmem:[%s256] sm:$0xff]
          %v258 = vld [vmem:[%s256 + $0x8] sm:$0xff]
          %v259 = vld [vmem:[%s211] sm:$0xff]
          %v260 = vld [vmem:[%s211 + $0x8] sm:$0xff]
          %v261 = vld [vmem:[%s211 + $0x10] sm:$0xff]
          %v262 = vld [vmem:[%s211 + $0x18] sm:$0xff]
          %v263 = vld [vmem:[%s211 + $0x20] sm:$0xff]
          %v264 = vld [vmem:[%s211 + $0x28] sm:$0xff]
          %v265 = vld [vmem:[%s211 + $0x30] sm:$0xff]
          %v266 = vld [vmem:[%s211 + $0x38] sm:$0xff]
          %v267 = vld [vmem:[%s211 + $0x40] sm:$0xff]
          %v268 = vld [vmem:[%s211 + $0x48] sm:$0xff]
          %v269 = vld [vmem:[%s211 + $0x50] sm:$0xff]
          %v270 = vld [vmem:[%s211 + $0x58] sm:$0xff]
          %v271 = vld [vmem:[%s211 + $0x60] sm:$0xff]
          %v272 = vld [vmem:[%s211 + $0x68] sm:$0xff]
          %v273 = vld [vmem:[%s211 + $0x70] sm:$0xff]
          %v274 = vld [vmem:[%s211 + $0x78] sm:$0xff]
          %v275 = vld [vmem:[%s211 + $0x80] sm:$0xff]
          %v276 = vld [vmem:[%s211 + $0x88] sm:$0xff]
          %v277 = vld [vmem:[%s211 + $0x90] sm:$0xff]
          %v278 = vld [vmem:[%s211 + $0x98] sm:$0xff]
          %v279 = vld [vmem:[%s211 + $0xa0] sm:$0xff]
          %v280 = vld [vmem:[%s211 + $0xa8] sm:$0xff]
          %v281 = vld [vmem:[%s211 + $0xb0] sm:$0xff]
          %v282 = vld [vmem:[%s211 + $0xb8] sm:$0xff]
          %v283 = vld [vmem:[%s211 + $0xc0] sm:$0xff]
          %v284 = vld [vmem:[%s211 + $0xc8] sm:$0xff]
          %v285 = vld [vmem:[%s211 + $0xd0] sm:$0xff]
          %v286 = vld [vmem:[%s211 + $0xd8] sm:$0xff]
          %v287 = vld [vmem:[%s211 + $0xe0] sm:$0xff]
          %v288 = vld [vmem:[%s211 + $0xe8] sm:$0xff]
          %v289 = vld [vmem:[%s211 + $0xf0] sm:$0xff]
          %v290 = vld [vmem:[%s211 + $0xf8] sm:$0xff]
          %v291 = vld [vmem:[%s211 + $0x100] sm:$0xff]
          %v292 = vld [vmem:[%s211 + $0x108] sm:$0xff]
          %v293 = vld [vmem:[%s211 + $0x110] sm:$0xff]
          %v294 = vld [vmem:[%s211 + $0x118] sm:$0xff]
          %v295 = vld [vmem:[%s211 + $0x120] sm:$0xff]
          %v296 = vld [vmem:[%s211 + $0x128] sm:$0xff]
          %v297 = vld [vmem:[%s211 + $0x130] sm:$0xff]
          %v298 = vld [vmem:[%s211 + $0x138] sm:$0xff]
          %v299 = vld [vmem:[%s211 + $0x140] sm:$0xff]
          %v300 = vld [vmem:[%s211 + $0x148] sm:$0xff]
          %v301 = vld [vmem:[%s211 + $0x150] sm:$0xff]
          %v302 = vld [vmem:[%s211 + $0x158] sm:$0xff]
          %v303 = vld [vmem:[%s211 + $0x160] sm:$0xff]
          %v304 = vld [vmem:[%s211 + $0x168] sm:$0xff]
          %v305 = vld [vmem:[%s211 + $0x170] sm:$0xff]
          %v306 = vld [vmem:[%s211 + $0x178] sm:$0xff]
          %v307 = vld [vmem:[%s211 + $0x180] sm:$0xff]
          %v308 = vld [vmem:[%s211 + $0x188] sm:$0xff]
          %v309 = vld [vmem:[%s211 + $0x190] sm:$0xff]
          %v310 = vld [vmem:[%s211 + $0x198] sm:$0xff]
          %v311 = vld [vmem:[%s211 + $0x1a0] sm:$0xff]
          %v312 = vld [vmem:[%s211 + $0x1a8] sm:$0xff]
          %v313 = vld [vmem:[%s211 + $0x1b0] sm:$0xff]
          %v314 = vld [vmem:[%s211 + $0x1b8] sm:$0xff]
          %v315 = vld [vmem:[%s211 + $0x1c0] sm:$0xff]
          %v316 = vld [vmem:[%s211 + $0x1c8] sm:$0xff]
          %v317 = vld [vmem:[%s211 + $0x1d0] sm:$0xff]
          %v318 = vld [vmem:[%s211 + $0x1d8] sm:$0xff]
          %v319 = vld [vmem:[%s211 + $0x1e0] sm:$0xff]
          %v320 = vld [vmem:[%s211 + $0x1e8] sm:$0xff]
          %v321 = vld [vmem:[%s211 + $0x1f0] sm:$0xff]
          %v322 = vld [vmem:[%s211 + $0x1f8] sm:$0xff]
          %v323 = vld [vmem:[%s211 + $0x200] sm:$0xff]
          %v324 = vld [vmem:[%s211 + $0x208] sm:$0xff]
          %v325 = vld [vmem:[%s211 + $0x210] sm:$0xff]
          %v326 = vld [vmem:[%s211 + $0x218] sm:$0xff]
          %v327 = vld [vmem:[%s211 + $0x220] sm:$0xff]
          %v328 = vld [vmem:[%s211 + $0x228] sm:$0xff]
          %v329 = vld [vmem:[%s211 + $0x230] sm:$0xff]
          %v330 = vld [vmem:[%s211 + $0x238] sm:$0xff]
          %v331 = vld [vmem:[%s211 + $0x240] sm:$0xff]
          %v332 = vld [vmem:[%s211 + $0x248] sm:$0xff]
          %v333 = vld [vmem:[%s211 + $0x250] sm:$0xff]
          %v334 = vld [vmem:[%s211 + $0x258] sm:$0xff]
          %v335 = vld [vmem:[%s211 + $0x260] sm:$0xff]
          %v336 = vld [vmem:[%s211 + $0x268] sm:$0xff]
          %v337 = vld [vmem:[%s211 + $0x270] sm:$0xff]
          %v338 = vld [vmem:[%s211 + $0x278] sm:$0xff]
          %v339 = vld [vmem:[%s211 + $0x280] sm:$0xff]
          %v340 = vld [vmem:[%s211 + $0x288] sm:$0xff]
          %v341 = vld [vmem:[%s211 + $0x290] sm:$0xff]
          %v342 = vld [vmem:[%s211 + $0x298] sm:$0xff]
          %v343 = vld [vmem:[%s211 + $0x2a0] sm:$0xff]
          %v344 = vld [vmem:[%s211 + $0x2a8] sm:$0xff]
          %v345 = vld [vmem:[%s211 + $0x2b0] sm:$0xff]
          %v346 = vld [vmem:[%s211 + $0x2b8] sm:$0xff]
          %v347 = vld [vmem:[%s211 + $0x2c0] sm:$0xff]
          %v348 = vld [vmem:[%s211 + $0x2c8] sm:$0xff]
          %v349 = vld [vmem:[%s211 + $0x2d0] sm:$0xff]
          %v350 = vld [vmem:[%s211 + $0x2d8] sm:$0xff]
          %v351 = vld [vmem:[%s211 + $0x2e0] sm:$0xff]
          %v352 = vld [vmem:[%s211 + $0x2e8] sm:$0xff]
          %v353 = vld [vmem:[%s211 + $0x2f0] sm:$0xff]
          %v354 = vld [vmem:[%s211 + $0x2f8] sm:$0xff]
          %v355 = vld [vmem:[%s211 + $0x300] sm:$0xff]
          %v356 = vld [vmem:[%s211 + $0x308] sm:$0xff]
          %v357 = vld [vmem:[%s211 + $0x310] sm:$0xff]
          %v358 = vld [vmem:[%s211 + $0x318] sm:$0xff]
          %v359 = vld [vmem:[%s211 + $0x320] sm:$0xff]
          %v360 = vld [vmem:[%s211 + $0x328] sm:$0xff]
          %v361 = vld [vmem:[%s211 + $0x330] sm:$0xff]
          %v362 = vld [vmem:[%s211 + $0x338] sm:$0xff]
          %v363 = vld [vmem:[%s211 + $0x340] sm:$0xff]
          %v364 = vld [vmem:[%s211 + $0x348] sm:$0xff]
          %v365 = vld [vmem:[%s211 + $0x350] sm:$0xff]
          %v366 = vld [vmem:[%s211 + $0x358] sm:$0xff]
          %v367 = vld [vmem:[%s211 + $0x360] sm:$0xff]
          %v368 = vld [vmem:[%s211 + $0x368] sm:$0xff]
          %v369 = vld [vmem:[%s211 + $0x370] sm:$0xff]
          %v370 = vld [vmem:[%s211 + $0x378] sm:$0xff]
          %v371 = vld [vmem:[%s211 + $0x380] sm:$0xff]
          %v372 = vld [vmem:[%s211 + $0x388] sm:$0xff]
          %v373 = vld [vmem:[%s211 + $0x390] sm:$0xff]
          %v374 = vld [vmem:[%s211 + $0x398] sm:$0xff]
          %v375 = vld [vmem:[%s211 + $0x3a0] sm:$0xff]
          %v376 = vld [vmem:[%s211 + $0x3a8] sm:$0xff]
          %v377 = vld [vmem:[%s211 + $0x3b0] sm:$0xff]
          %v378 = vld [vmem:[%s211 + $0x3b8] sm:$0xff]
          %v379 = vld [vmem:[%s211 + $0x3c0] sm:$0xff]
          %v380 = vld [vmem:[%s211 + $0x3c8] sm:$0xff]
          %v381 = vld [vmem:[%s211 + $0x3d0] sm:$0xff]
          %v382 = vld [vmem:[%s211 + $0x3d8] sm:$0xff]
          %v383 = vld [vmem:[%s211 + $0x3e0] sm:$0xff]
          %v384 = vld [vmem:[%s211 + $0x3e8] sm:$0xff]
          %v385 = vld [vmem:[%s211 + $0x3f0] sm:$0xff]
          %v386 = vld [vmem:[%s211 + $0x3f8] sm:$0xff]
          %387 = vmatpush.msra.mxu0 %v319
          %388 = vmatpush.msra.mxu0 %v315
          %389 = vmatpush.msra.mxu0 %v311
          %390 = vmatpush.msra.mxu0 %v307
          %391 = vmatpush.msra.mxu0 %v303
          %392 = vmatpush.msra.mxu0 %v299
          %393 = vmatpush.msra.mxu0 %v295
          %394 = vmatpush.msra.mxu0 %v291
          %395 = vmatpush.msra.mxu0 %v287
          %396 = vmatpush.msra.mxu0 %v283
          %397 = vmatpush.msra.mxu0 %v279
          %398 = vmatpush.msra.mxu0 %v275
          %399 = vmatpush.msra.mxu0 %v271
          %400 = vmatpush.msra.mxu0 %v267
          %401 = vmatpush.msra.mxu0 %v263
          %402 = vmatpush.msra.mxu0 %v259
          %403 = vmatmul.f32.gmra.mxu0 %v257
          %v404 = vpop.f32.mrf.mxu0
          %v405 = vadd.f32 0.0, %v404
          %406 = vdwg.mxu0
          %407 = vmatpush.msra.mxu0 %v383
          %408 = vmatpush.msra.mxu0 %v379
          %409 = vmatpush.msra.mxu0 %v375
          %410 = vmatpush.msra.mxu0 %v371
          %411 = vmatpush.msra.mxu0 %v367
          %412 = vmatpush.msra.mxu0 %v363
          %413 = vmatpush.msra.mxu0 %v359
          %414 = vmatpush.msra.mxu0 %v355
          %415 = vmatpush.msra.mxu0 %v351
          %416 = vmatpush.msra.mxu0 %v347
          %417 = vmatpush.msra.mxu0 %v343
          %418 = vmatpush.msra.mxu0 %v339
          %419 = vmatpush.msra.mxu0 %v335
          %420 = vmatpush.msra.mxu0 %v331
          %421 = vmatpush.msra.mxu0 %v327
          %422 = vmatpush.msra.mxu0 %v323
          %423 = vmatmul.f32.gmra.mxu0 %v258
          %v424 = vpop.f32.mrf.mxu0
          %v425 = vadd.f32 %v405, %v424
          %426 = vdwg.mxu0
          %427 = vmatpush.msra.mxu0 %v320
          %428 = vmatpush.msra.mxu0 %v316
          %429 = vmatpush.msra.mxu0 %v312
          %430 = vmatpush.msra.mxu0 %v308
          %431 = vmatpush.msra.mxu0 %v304
          %432 = vmatpush.msra.mxu0 %v300
          %433 = vmatpush.msra.mxu0 %v296
          %434 = vmatpush.msra.mxu0 %v292
          %435 = vmatpush.msra.mxu0 %v288
          %436 = vmatpush.msra.mxu0 %v284
          %437 = vmatpush.msra.mxu0 %v280
          %438 = vmatpush.msra.mxu0 %v276
          %439 = vmatpush.msra.mxu0 %v272
          %440 = vmatpush.msra.mxu0 %v268
          %441 = vmatpush.msra.mxu0 %v264
          %442 = vmatpush.msra.mxu0 %v260
          %443 = vmatmul.f32.gmra.mxu0 %v257
          %v444 = vpop.f32.mrf.mxu0
          %v445 = vadd.f32 0.0, %v444
          %446 = vdwg.mxu0
          %447 = vmatpush.msra.mxu0 %v384
          %448 = vmatpush.msra.mxu0 %v380
          %449 = vmatpush.msra.mxu0 %v376
          %450 = vmatpush.msra.mxu0 %v372
          %451 = vmatpush.msra.mxu0 %v368
          %452 = vmatpush.msra.mxu0 %v364
          %453 = vmatpush.msra.mxu0 %v360
          %454 = vmatpush.msra.mxu0 %v356
          %455 = vmatpush.msra.mxu0 %v352
          %456 = vmatpush.msra.mxu0 %v348
          %457 = vmatpush.msra.mxu0 %v344
          %458 = vmatpush.msra.mxu0 %v340
          %459 = vmatpush.msra.mxu0 %v336
          %460 = vmatpush.msra.mxu0 %v332
          %461 = vmatpush.msra.mxu0 %v328
          %462 = vmatpush.msra.mxu0 %v324
          %463 = vmatmul.f32.gmra.mxu0 %v258
          %v464 = vpop.f32.mrf.mxu0
          %v465 = vadd.f32 %v445, %v464
          %466 = vdwg.mxu0
          %467 = vmatpush.msra.mxu0 %v321
          %468 = vmatpush.msra.mxu0 %v317
          %469 = vmatpush.msra.mxu0 %v313
          %470 = vmatpush.msra.mxu0 %v309
          %471 = vmatpush.msra.mxu0 %v305
          %472 = vmatpush.msra.mxu0 %v301
          %473 = vmatpush.msra.mxu0 %v297
          %474 = vmatpush.msra.mxu0 %v293
          %475 = vmatpush.msra.mxu0 %v289
          %476 = vmatpush.msra.mxu0 %v285
          %477 = vmatpush.msra.mxu0 %v281
          %478 = vmatpush.msra.mxu0 %v277
          %479 = vmatpush.msra.mxu0 %v273
          %480 = vmatpush.msra.mxu0 %v269
          %481 = vmatpush.msra.mxu0 %v265
          %482 = vmatpush.msra.mxu0 %v261
          %483 = vmatmul.f32.gmra.mxu0 %v257
          %v484 = vpop.f32.mrf.mxu0
          %v485 = vadd.f32 0.0, %v484
          %486 = vdwg.mxu0
          %487 = vmatpush.msra.mxu0 %v385
          %488 = vmatpush.msra.mxu0 %v381
          %489 = vmatpush.msra.mxu0 %v377
          %490 = vmatpush.msra.mxu0 %v373
          %491 = vmatpush.msra.mxu0 %v369
          %492 = vmatpush.msra.mxu0 %v365
          %493 = vmatpush.msra.mxu0 %v361
          %494 = vmatpush.msra.mxu0 %v357
          %495 = vmatpush.msra.mxu0 %v353
          %496 = vmatpush.msra.mxu0 %v349
          %497 = vmatpush.msra.mxu0 %v345
          %498 = vmatpush.msra.mxu0 %v341
          %499 = vmatpush.msra.mxu0 %v337
          %500 = vmatpush.msra.mxu0 %v333
          %501 = vmatpush.msra.mxu0 %v329
          %502 = vmatpush.msra.mxu0 %v325
          %503 = vmatmul.f32.gmra.mxu0 %v258
          %v504 = vpop.f32.mrf.mxu0
          %v505 = vadd.f32 %v485, %v504
          %506 = vdwg.mxu0
          %507 = vmatpush.msra.mxu0 %v322
          %508 = vmatpush.msra.mxu0 %v318
          %509 = vmatpush.msra.mxu0 %v314
          %510 = vmatpush.msra.mxu0 %v310
          %511 = vmatpush.msra.mxu0 %v306
          %512 = vmatpush.msra.mxu0 %v302
          %513 = vmatpush.msra.mxu0 %v298
          %514 = vmatpush.msra.mxu0 %v294
          %515 = vmatpush.msra.mxu0 %v290
          %516 = vmatpush.msra.mxu0 %v286
          %517 = vmatpush.msra.mxu0 %v282
          %518 = vmatpush.msra.mxu0 %v278
          %519 = vmatpush.msra.mxu0 %v274
          %520 = vmatpush.msra.mxu0 %v270
          %521 = vmatpush.msra.mxu0 %v266
          %522 = vmatpush.msra.mxu0 %v262
          %523 = vmatmul.f32.gmra.mxu0 %v257
          %v524 = vpop.f32.mrf.mxu0
          %v525 = vadd.f32 0.0, %v524
          %526 = vdwg.mxu0
          %527 = vmatpush.msra.mxu0 %v386
          %528 = vmatpush.msra.mxu0 %v382
          %529 = vmatpush.msra.mxu0 %v378
          %530 = vmatpush.msra.mxu0 %v374
          %531 = vmatpush.msra.mxu0 %v370
          %532 = vmatpush.msra.mxu0 %v366
          %533 = vmatpush.msra.mxu0 %v362
          %534 = vmatpush.msra.mxu0 %v358
          %535 = vmatpush.msra.mxu0 %v354
          %536 = vmatpush.msra.mxu0 %v350
          %537 = vmatpush.msra.mxu0 %v346
          %538 = vmatpush.msra.mxu0 %v342
          %539 = vmatpush.msra.mxu0 %v338
          %540 = vmatpush.msra.mxu0 %v334
          %541 = vmatpush.msra.mxu0 %v330
          %542 = vmatpush.msra.mxu0 %v326
          %543 = vmatmul.f32.gmra.mxu0 %v258
          %v544 = vpop.f32.mrf.mxu0
          %v545 = vadd.f32 %v525, %v544
          %546 = vdwg.mxu0
          %v547 = vadd.f32 %v250, %v425
          %v548 = vadd.f32 %v251, %v465
          %v549 = vadd.f32 %v252, %v505
          %v550 = vadd.f32 %v253, %v545
          %551 = vst [vmem:[#allocation10] sm:$0xff] %v547
          %552 = vst [vmem:[#allocation10 + $0x8] sm:$0xff] %v548
          %553 = vst [vmem:[#allocation10 + $0x10] sm:$0xff] %v549
          %554 = vst [vmem:[#allocation10 + $0x18] sm:$0xff] %v550
        $region44: #{tpu_custom_call.1} parent=27 // pred_fallthru
          _
        // Predicated region
        $region45: #{tpu_custom_call.1} parent=27 // pred_check
          %p555 = pneg %p128
        $region46: #{tpu_custom_call.1} parent=27 // pred_check_branch
          %557 = sbr.rel (%p555) target = $region48
        $region47: #{tpu_custom_call.1} parent=27 // pred_region
          %s558 = smul.u32 4, %s35
          %560 = vsyncadd [#allocation7], 0
          %s561 = smul.addr %s34, 4
          %s562 = sadd.s32 %s558, %s561
          %s563 = smul.addr %s562, 8
          %s564 = scalar_lea.hbm %s4, %s563
          %s566 = sshll.u32 [#allocation10], 4
          %s567 = int_to_ptr.vmem [resolvable:$true] %s566
          %s568 = sshll.u32 %s564, 4
          %s569 = int_to_ptr.hbm [resolvable:$true] %s568
          %571 = dma.vmem_to_hbm [thread:$0]  %s567, 512, %s569, [#allocation7]
        $region48: #{tpu_custom_call.1} parent=27 // pred_fallthru
          _
        // Predicated region
        $region49: #{tpu_custom_call.1} parent=27 // pred_check
          %p572 = pneg %p128
        $region50: #{tpu_custom_call.1} parent=27 // pred_check_branch
          %574 = sbr.rel (%p572) target = $region52
        $region51: #{tpu_custom_call.1} parent=27 // pred_region
          %576 = dma.done [#allocation7], 512
        $region52: #{tpu_custom_call.1} parent=27 // pred_fallthru
          _
      $region28: #{tpu_custom_call.1} parent=5 // pred_fallthru
        _
      %p577 = scmp.le.s32.totalorder 2, %s24
      // Predicated region
      $region53: #{tpu_custom_call.1} parent=5 // pred_check
        %p578 = pneg %p577
      $region54: #{tpu_custom_call.1} parent=5 // pred_check_branch
        %580 = sbr.rel (%p578) target = $region56
      $region55: #{tpu_custom_call.1} parent=5 // pred_region
        %s581 = ssub.s32 %s24, 2
      $region56: #{tpu_custom_call.1} parent=5 // pred_fallthru
        _
    $region6: #{tpu_custom_call.1} parent=1 // loop_footer
      %s28 = sadd.s32 1, %s24
    $region7: #{tpu_custom_call.1} parent=1 // loop_footer_branch
      %23 = sbr.rel target = $region3
    $region8: #{tpu_custom_call.1} parent=1 // loop_exit
      _
    %582 = vsyncpa [#allocation6], 1
    %s583 = scalar_lea.sflag [#allocation6], 1
    %584 = vsyncpa %s583, 1
    %585 = vsyncpa [#allocation9], 1
    %s586 = scalar_lea.sflag [#allocation9], 1
    %587 = vsyncpa %s586, 1
    %588 = vsyncpa [#allocation7], 1
    %s589 = scalar_lea.sflag [#allocation7], 1
    %590 = vsyncpa %s589, 1

</llo_original>
